<compile_context>
chip_gen: v5e
topology: v5e:2x2
jax: 0.10.0
libtpu: 0.0.40
codegen_flags: <defaults>
</compile_context>

<pallas_src>
import jax
import jax.numpy as jnp
from jax.experimental import pallas as pl
from jax.experimental.pallas import tpu as pltpu

# ----- small, module-consistent sizes -----
BATCH = 8            # sublane-full batch (amortizes fixed kernel overhead)
SEQ = 8              # sequence length
HIDDEN = 32          # "bert.config.hidden_size" (real: 768, shrunk for demo)
FC1 = 512            # self.fc1 = nn.Linear(hidden, 512)
NUM_CLASSES = 4      # len(class_names)
PAD_CLASSES = 128    # lane-dense padded logits width
VOCAB = 128          # synthetic vocab for the embedding stub


def fused_kernel(ids_ref, mask_ref,
                 emb_wp_ref, bp_ref,   # folded (embedding @ pooler_W) [V,H] bf16, [1,H] f32
                 w1_ref, b1_ref,       # fc1  [H, 512] bf16, [1, 512] f32
                 w2_ref, b2_ref,       # out  [512, 128] bf16 (cols 4..127 zero), [1, 128] f32
                 o_ref):               # padded logits [B, 128] f32
    ids = ids_ref[...]                                 # (B, S, 1) int32
    mask = mask_ref[...].astype(jnp.float32)           # (B, S, 1) f32 (cast in-kernel)

    # Fused embedding gather + mask-weighted mean pooling + pooler dense as ONE
    # MXU contraction:
    #   pooler_in[b, h] = (1/denom[b]) * sum_s mask[b,s] * (emb @ Wp)[ids[b,s], h]
    #                   = (counts[b, :] / denom[b]) @ emb_wp
    vocab_iota = jax.lax.broadcasted_iota(jnp.int32, (BATCH, SEQ, VOCAB), 2)
    weighted_onehot = jnp.where(ids == vocab_iota, mask, 0.0)     # (B, S, V) f32
    counts = jnp.sum(weighted_onehot, axis=1)                     # (B, V)

    denom = jnp.maximum(jnp.sum(mask, axis=1), 1.0)               # (B, 1)
    counts_scaled = counts * pl.reciprocal(denom, approx=False)   # 1/denom folded pre-MXU

    # BERT-style pooler (dense folded into the table) + tanh -> pooler_output
    pooler_out = jnp.tanh(
        jnp.dot(counts_scaled.astype(jnp.bfloat16), emb_wp_ref[...],
                preferred_element_type=jnp.float32) + bp_ref[...])   # (B, H)

    # fc1 + ReLU
    h = jnp.maximum(
        jnp.dot(pooler_out.astype(jnp.bfloat16), w1_ref[...],
                preferred_element_type=jnp.float32) + b1_ref[...],
        0.0)                                                         # (B, 512)

    # dropout(p=0.2): identity in eval mode

    # out head: lane-dense padded logits (first NUM_CLASSES columns are real)
    o_ref[...] = jnp.dot(h.astype(jnp.bfloat16), w2_ref[...],
                         preferred_element_type=jnp.float32) + b2_ref[...]


@jax.jit
def news_classifier_forward(input_ids, attention_mask, params):
    """(B, S) int32 ids / mask -> (B, 128) padded f32 logits (cols 0..3 real)."""
    # rank-expand only (layout-preserving bitcast); all dtype casting is in-kernel
    ids3 = input_ids.reshape(BATCH, SEQ, 1)
    mask3 = attention_mask.reshape(BATCH, SEQ, 1)

    vmem = pl.BlockSpec(memory_space=pltpu.MemorySpace.VMEM)

    return pl.pallas_call(
        fused_kernel,
        out_shape=jax.ShapeDtypeStruct((BATCH, PAD_CLASSES), jnp.float32),
        in_specs=[vmem] * 8,
        out_specs=vmem,
    )(ids3, mask3,
      params["emb_wp"], params["bp"],
      params["w1"], params["b1"],
      params["w2"], params["b2"])


def init_params(key):
    ks = jax.random.split(key, 6)
    scale = 0.02
    embedding = scale * jax.random.normal(ks[0], (VOCAB, HIDDEN), jnp.float32)
    wp = scale * jax.random.normal(ks[1], (HIDDEN, HIDDEN), jnp.float32)
    w1 = scale * jax.random.normal(ks[2], (HIDDEN, FC1), jnp.float32)
    b1 = scale * jax.random.normal(ks[3], (1, FC1), jnp.float32)
    w2 = scale * jax.random.normal(ks[4], (FC1, NUM_CLASSES), jnp.float32)
    b2 = scale * jax.random.normal(ks[5], (1, NUM_CLASSES), jnp.float32)

    # fold the pooler dense into the embedding table (pure associativity:
    # ((counts/denom) @ emb) @ Wp == (counts/denom) @ (emb @ Wp))
    emb_wp = (embedding @ wp).astype(jnp.bfloat16)

    # zero-pad the 4-wide head to a lane-dense 128-wide output
    w2_pad = jnp.zeros((FC1, PAD_CLASSES), jnp.float32).at[:, :NUM_CLASSES].set(w2)
    b2_pad = jnp.zeros((1, PAD_CLASSES), jnp.float32).at[:, :NUM_CLASSES].set(b2)

    return {
        "emb_wp": emb_wp,
        "bp": jnp.zeros((1, HIDDEN), jnp.float32),
        "w1": w1.astype(jnp.bfloat16),
        "b1": b1,
        "w2": w2_pad.astype(jnp.bfloat16),
        "b2": b2_pad,
    }


if __name__ == "__main__":
    key = jax.random.PRNGKey(0)
    k_ids, k_params = jax.random.split(key)

    input_ids = jax.random.randint(k_ids, (BATCH, SEQ), 0, VOCAB, dtype=jnp.int32)
    # make the last two tokens of batch element 1 padding
    attention_mask = jnp.ones((BATCH, SEQ), jnp.int32).at[1, SEQ - 2:].set(0)

    params = init_params(k_params)

    padded_logits = news_classifier_forward(input_ids, attention_mask, params)
    padded_logits = jax.block_until_ready(padded_logits)

    # final consumer slices the 4 real classes out of the lane-dense slab
    logits = padded_logits[:, :NUM_CLASSES]

    assert padded_logits.shape == (BATCH, PAD_CLASSES)
    assert logits.shape == (BATCH, NUM_CLASSES)
    assert logits.dtype == jnp.float32
    assert bool(jnp.all(jnp.isfinite(logits)))
    print("KERNEL_OK")
</pallas_src>

<mosaic_0001>
module attributes {stable_mosaic.version = 11 : i64} {
  func.func @fused_kernel(%arg0: memref<8x8x1xi32, #tpu.memory_space<vmem>>, %arg1: memref<8x8x1xi32, #tpu.memory_space<vmem>>, %arg2: memref<128x32xbf16, #tpu.memory_space<vmem>>, %arg3: memref<1x32xf32, #tpu.memory_space<vmem>>, %arg4: memref<32x512xbf16, #tpu.memory_space<vmem>>, %arg5: memref<1x512xf32, #tpu.memory_space<vmem>>, %arg6: memref<512x128xbf16, #tpu.memory_space<vmem>>, %arg7: memref<1x128xf32, #tpu.memory_space<vmem>>, %arg8: memref<8x128xf32, #tpu.memory_space<vmem>>) attributes {dimension_semantics = [], scalar_prefetch = 0 : i64, scratch_operands = 0 : i64, tpu.core_type = #tpu.core_type<tc>} {
    %c0 = arith.constant 0 : index
    %c0_0 = arith.constant 0 : index
    %c0_1 = arith.constant 0 : index
    %0 = vector.load %arg0[%c0, %c0_0, %c0_1] : memref<8x8x1xi32, #tpu.memory_space<vmem>>, vector<8x8x1xi32>
    %c0_2 = arith.constant 0 : index
    %c0_3 = arith.constant 0 : index
    %c0_4 = arith.constant 0 : index
    %1 = vector.load %arg1[%c0_2, %c0_3, %c0_4] : memref<8x8x1xi32, #tpu.memory_space<vmem>>, vector<8x8x1xi32>
    %2 = arith.sitofp %1 : vector<8x8x1xi32> to vector<8x8x1xf32>
    %3 = tpu.iota {dimensions = array<i32: 2>} : vector<8x8x128xi32>
    %4 = vector.broadcast %0 : vector<8x8x1xi32> to vector<8x8x128xi32>
    %5 = arith.cmpi eq, %4, %3 : vector<8x8x128xi32>
    %cst = arith.constant 0.000000e+00 : f32
    %6 = vector.shape_cast %2 : vector<8x8x1xf32> to vector<8x8x1xf32>
    %7 = vector.broadcast %6 : vector<8x8x1xf32> to vector<8x8x128xf32>
    %8 = vector.broadcast %cst : f32 to vector<8x8x128xf32>
    %9 = arith.select %5, %7, %8 : vector<8x8x128xi1>, vector<8x8x128xf32>
    %cst_5 = arith.constant dense<0.000000e+00> : vector<8x128xf32>
    %10 = vector.multi_reduction <add>, %9, %cst_5 [1] : vector<8x8x128xf32> to vector<8x128xf32>
    %cst_6 = arith.constant dense<0.000000e+00> : vector<8x1xf32>
    %11 = vector.multi_reduction <add>, %2, %cst_6 [1] : vector<8x8x1xf32> to vector<8x1xf32>
    %cst_7 = arith.constant 1.000000e+00 : f32
    %12 = vector.broadcast %cst_7 : f32 to vector<8x1xf32>
    %13 = arith.maximumf %11, %12 : vector<8x1xf32>
    %14 = tpu.reciprocal %13 : vector<8x1xf32> -> vector<8x1xf32>
    %15 = vector.broadcast %14 : vector<8x1xf32> to vector<8x128xf32>
    %16 = arith.mulf %10, %15 : vector<8x128xf32>
    %17 = arith.truncf %16 : vector<8x128xf32> to vector<8x128xbf16>
    %c0_8 = arith.constant 0 : index
    %c0_9 = arith.constant 0 : index
    %18 = vector.load %arg2[%c0_8, %c0_9] : memref<128x32xbf16, #tpu.memory_space<vmem>>, vector<128x32xbf16>
    %cst_10 = arith.constant dense<0.000000e+00> : vector<8x32xf32>
    %19 = tpu.matmul %17, %18, %cst_10 {dimension_numbers = #tpu.dot_dimension_numbers<[1], [0], [0], [1], [0, 0, 1, 1], [], []>} : vector<8x128xbf16>, vector<128x32xbf16>, vector<8x32xf32> -> vector<8x32xf32>
    %c0_11 = arith.constant 0 : index
    %c0_12 = arith.constant 0 : index
    %20 = vector.load %arg3[%c0_11, %c0_12] : memref<1x32xf32, #tpu.memory_space<vmem>>, vector<1x32xf32>
    %21 = vector.broadcast %20 : vector<1x32xf32> to vector<8x32xf32>
    %22 = arith.addf %19, %21 : vector<8x32xf32>
    %23 = math.tanh %22 : vector<8x32xf32>
    %24 = arith.truncf %23 : vector<8x32xf32> to vector<8x32xbf16>
    %c0_13 = arith.constant 0 : index
    %c0_14 = arith.constant 0 : index
    %25 = vector.load %arg4[%c0_13, %c0_14] : memref<32x512xbf16, #tpu.memory_space<vmem>>, vector<32x512xbf16>
    %cst_15 = arith.constant dense<0.000000e+00> : vector<8x512xf32>
    %26 = tpu.matmul %24, %25, %cst_15 {dimension_numbers = #tpu.dot_dimension_numbers<[1], [0], [0], [1], [0, 0, 1, 1], [], []>} : vector<8x32xbf16>, vector<32x512xbf16>, vector<8x512xf32> -> vector<8x512xf32>
    %c0_16 = arith.constant 0 : index
    %c0_17 = arith.constant 0 : index
    %27 = vector.load %arg5[%c0_16, %c0_17] : memref<1x512xf32, #tpu.memory_space<vmem>>, vector<1x512xf32>
    %28 = vector.broadcast %27 : vector<1x512xf32> to vector<8x512xf32>
    %29 = arith.addf %26, %28 : vector<8x512xf32>
    %cst_18 = arith.constant 0.000000e+00 : f32
    %30 = vector.broadcast %cst_18 : f32 to vector<8x512xf32>
    %31 = arith.maximumf %29, %30 : vector<8x512xf32>
    %32 = arith.truncf %31 : vector<8x512xf32> to vector<8x512xbf16>
    %c0_19 = arith.constant 0 : index
    %c0_20 = arith.constant 0 : index
    %33 = vector.load %arg6[%c0_19, %c0_20] : memref<512x128xbf16, #tpu.memory_space<vmem>>, vector<512x128xbf16>
    %cst_21 = arith.constant dense<0.000000e+00> : vector<8x128xf32>
    %34 = tpu.matmul %32, %33, %cst_21 {dimension_numbers = #tpu.dot_dimension_numbers<[1], [0], [0], [1], [0, 0, 1, 1], [], []>} : vector<8x512xbf16>, vector<512x128xbf16>, vector<8x128xf32> -> vector<8x128xf32>
    %c0_22 = arith.constant 0 : index
    %c0_23 = arith.constant 0 : index
    %35 = vector.load %arg7[%c0_22, %c0_23] : memref<1x128xf32, #tpu.memory_space<vmem>>, vector<1x128xf32>
    %36 = vector.broadcast %35 : vector<1x128xf32> to vector<8x128xf32>
    %37 = arith.addf %34, %36 : vector<8x128xf32>
    %c0_24 = arith.constant 0 : index
    %c0_25 = arith.constant 0 : index
    %38 = vector.load %arg8[%c0_24, %c0_25] : memref<8x128xf32, #tpu.memory_space<vmem>>, vector<8x128xf32>
    tpu.vector_store %arg8[%c0_24, %c0_25], %37 {strides = array<i32>} : memref<8x128xf32, #tpu.memory_space<vmem>>, vector<8x128xf32>,
    return
  }
}

</mosaic_0001>

<llo_original>
// kernel: news_classifier_forward.1
$region0: #{news_classifier_forward.1}
  #allocation0 [shape = 'u32[]', space=smem, size = 0x4, offset = 0x4, fixed_abs, tag = 'smem constant byte address 0x4 - core index']
  #allocation1 [shape = 'u32[72,128]{1,0:T(1,128)}', space=vmem, size = 0x9000, scoped, tag = 'internal scratch']
  %s0 = inlined_call_operand.vmem [shape: s32[8,8,1], index: 0, kind: input, shape index: {}]
  %s1 = inlined_call_operand.vmem [shape: s32[8,8,1], index: 1, kind: input, shape index: {}]
  %s2 = inlined_call_operand.vmem [shape: bf16[128,32], index: 2, kind: input, shape index: {}]
  %s3 = inlined_call_operand.vmem [shape: f32[1,32], index: 3, kind: input, shape index: {}]
  %s4 = inlined_call_operand.vmem [shape: bf16[32,512], index: 4, kind: input, shape index: {}]
  %s5 = inlined_call_operand.vmem [shape: f32[1,512], index: 5, kind: input, shape index: {}]
  %s6 = inlined_call_operand.hbm [shape: bf16[512,128], index: 6, kind: input, shape index: {}]
  %s7 = inlined_call_operand.vmem [shape: f32[1,128], index: 7, kind: input, shape index: {}]
  %s8 = inlined_call_operand.hbm [shape: f32[8,128], index: 8, kind: output, shape index: {}]
  %s9 = sld [smem:[#allocation0]]
  $region46: #{news_classifier_forward.1} parent=0
    _
  %s11 = ssub.s32 1, %s9
  %s12 = scalar_select 0, %s11, %s9
  $region1: #{news_classifier_forward.1} parent=0
    #allocation2 [shape = 'u8[131072]{0}', space=vmem, size = 0x20000, scoped, tag = 'input window, operand 6, single buffered']
    #allocation3 [shape = 's32[1]{0}', space=sflag, size = 0x4, scoped, tag = 'scoped memory for news_classifier_forward.1']
    #allocation4 [shape = 's32[1]{0}', space=sflag, size = 0x4, scoped, tag = 'scoped memory for news_classifier_forward.1']
    #allocation5 [shape = 'u8[4096]{0}', space=vmem, size = 0x1000, scoped, tag = 'output window, operand 0, single buffered']
    %13 = vsyncpa [#allocation3], 0
    %14 = vsyncpa [#allocation4], 0
    // Predicated region
    $region2: #{news_classifier_forward.1} parent=1 // pred_check
      _
    $region3: #{news_classifier_forward.1} parent=1 // pred_check_branch
      %16 = sbr.rel (0) target = $region5
    $region4: #{news_classifier_forward.1} parent=1 // pred_region
      _
    $region5: #{news_classifier_forward.1} parent=1 // pred_fallthru
      _
    // Predicated region
    $region6: #{news_classifier_forward.1} parent=1 // pred_check
      _
    $region7: #{news_classifier_forward.1} parent=1 // pred_check_branch
      %18 = sbr.rel (0) target = $region9
    $region8: #{news_classifier_forward.1} parent=1 // pred_region
      _
    $region9: #{news_classifier_forward.1} parent=1 // pred_fallthru
      _
    // Predicated region
    $region10: #{news_classifier_forward.1} parent=1 // pred_check
      _
    $region11: #{news_classifier_forward.1} parent=1 // pred_check_branch
      %20 = sbr.rel (0) target = $region13
    $region12: #{news_classifier_forward.1} parent=1 // pred_region
      _
    $region13: #{news_classifier_forward.1} parent=1 // pred_fallthru
      _
    // Predicated region
    $region14: #{news_classifier_forward.1} parent=1 // pred_check
      _
    $region15: #{news_classifier_forward.1} parent=1 // pred_check_branch
      %22 = sbr.rel (0) target = $region17
    $region16: #{news_classifier_forward.1} parent=1 // pred_region
      _
    $region17: #{news_classifier_forward.1} parent=1 // pred_fallthru
      _
    // Predicated region
    $region18: #{news_classifier_forward.1} parent=1 // pred_check
      _
    $region19: #{news_classifier_forward.1} parent=1 // pred_check_branch
      %24 = sbr.rel (0) target = $region21
    $region20: #{news_classifier_forward.1} parent=1 // pred_region
      _
    $region21: #{news_classifier_forward.1} parent=1 // pred_fallthru
      _
    // Predicated region
    $region22: #{news_classifier_forward.1} parent=1 // pred_check
      _
    $region23: #{news_classifier_forward.1} parent=1 // pred_check_branch
      %26 = sbr.rel (0) target = $region25
    $region24: #{news_classifier_forward.1} parent=1 // pred_region
      _
    $region25: #{news_classifier_forward.1} parent=1 // pred_fallthru
      _
    // Predicated region
    $region26: #{news_classifier_forward.1} parent=1 // pred_check
      _
    $region27: #{news_classifier_forward.1} parent=1 // pred_check_branch
      %28 = sbr.rel (0) target = $region29
    $region28: #{news_classifier_forward.1} parent=1 // pred_region
      %30 = vsyncadd [#allocation3], 0
      %s31 = sshll.u32 %s6, 4
      %s32 = int_to_ptr.hbm [resolvable:$true] %s31
      %s33 = sshll.u32 [#allocation2], 4
      %s34 = int_to_ptr.vmem [resolvable:$true] %s33
      %39 = dma.hbm_to_vmem [thread:$0]  %s32, 4096, %s34, [#allocation3], 64, 64, 4
    $region29: #{news_classifier_forward.1} parent=1 // pred_fallthru
      _
    // Predicated region
    $region30: #{news_classifier_forward.1} parent=1 // pred_check
      _
    $region31: #{news_classifier_forward.1} parent=1 // pred_check_branch
      %41 = sbr.rel (0) target = $region33
    $region32: #{news_classifier_forward.1} parent=1 // pred_region
      _
    $region33: #{news_classifier_forward.1} parent=1 // pred_fallthru
      _
    // Predicated region
    $region34: #{news_classifier_forward.1} parent=1 // pred_check
      _
    $region35: #{news_classifier_forward.1} parent=1 // pred_check_branch
      %43 = sbr.rel (0) target = $region37
    $region36: #{news_classifier_forward.1} parent=1 // pred_region
      %45 = dma.done [#allocation3], 4096
    $region37: #{news_classifier_forward.1} parent=1 // pred_fallthru
      _
    %v47 = vld [vmem:[%s0] sm:$0xff]
    %v48 = vld [vmem:[%s0 + $0x8] sm:$0xff]
    %v49 = vld [vmem:[%s0 + $0x10] sm:$0xff]
    %v50 = vld [vmem:[%s0 + $0x18] sm:$0xff]
    %v51 = vld [vmem:[%s0 + $0x20] sm:$0xff]
    %v52 = vld [vmem:[%s0 + $0x28] sm:$0xff]
    %v53 = vld [vmem:[%s0 + $0x30] sm:$0xff]
    %v54 = vld [vmem:[%s0 + $0x38] sm:$0xff]
    %v55 = vld [vmem:[%s1] sm:$0xff]
    %v56 = vld [vmem:[%s1 + $0x8] sm:$0xff]
    %v57 = vld [vmem:[%s1 + $0x10] sm:$0xff]
    %v58 = vld [vmem:[%s1 + $0x18] sm:$0xff]
    %v59 = vld [vmem:[%s1 + $0x20] sm:$0xff]
    %v60 = vld [vmem:[%s1 + $0x28] sm:$0xff]
    %v61 = vld [vmem:[%s1 + $0x30] sm:$0xff]
    %v62 = vld [vmem:[%s1 + $0x38] sm:$0xff]
    %v63 = vcvt.s32.f32 %v55
    %v64 = vcvt.s32.f32 %v56
    %v65 = vcvt.s32.f32 %v57
    %v66 = vcvt.s32.f32 %v58
    %v67 = vcvt.s32.f32 %v59
    %v68 = vcvt.s32.f32 %v60
    %v69 = vcvt.s32.f32 %v61
    %v70 = vcvt.s32.f32 %v62
    %v71 = vlaneseq
    %v72 = vand.u32 %v71, 127
    %73 = vset.pattern.permute.xlu0 0
    %74 = vperm.xlu0 %73, %v47
    %v75 = vpop.permute.xlu0 %74
    %76 = vset.pattern.permute.xlu0 0
    %77 = vperm.xlu0 %76, %v48
    %v78 = vpop.permute.xlu0 %77
    %79 = vset.pattern.permute.xlu0 0
    %80 = vperm.xlu0 %79, %v49
    %v81 = vpop.permute.xlu0 %80
    %82 = vset.pattern.permute.xlu0 0
    %83 = vperm.xlu0 %82, %v50
    %v84 = vpop.permute.xlu0 %83
    %85 = vset.pattern.permute.xlu0 0
    %86 = vperm.xlu0 %85, %v51
    %v87 = vpop.permute.xlu0 %86
    %88 = vset.pattern.permute.xlu0 0
    %89 = vperm.xlu0 %88, %v52
    %v90 = vpop.permute.xlu0 %89
    %91 = vset.pattern.permute.xlu0 0
    %92 = vperm.xlu0 %91, %v53
    %v93 = vpop.permute.xlu0 %92
    %94 = vset.pattern.permute.xlu0 0
    %95 = vperm.xlu0 %94, %v54
    %v96 = vpop.permute.xlu0 %95
    %vm97 = vcmp.eq.s32.totalorder %v75, %v72
    %vm98 = vcmp.eq.s32.totalorder %v78, %v72
    %vm99 = vcmp.eq.s32.totalorder %v81, %v72
    %vm100 = vcmp.eq.s32.totalorder %v84, %v72
    %vm101 = vcmp.eq.s32.totalorder %v87, %v72
    %vm102 = vcmp.eq.s32.totalorder %v90, %v72
    %vm103 = vcmp.eq.s32.totalorder %v93, %v72
    %vm104 = vcmp.eq.s32.totalorder %v96, %v72
    %106 = vset.pattern.permute.xlu0 0
    %107 = vperm.xlu0 %106, %v63
    %v108 = vpop.permute.xlu0 %107
    %111 = vset.pattern.permute.xlu0 0
    %112 = vperm.xlu0 %111, %v64
    %v113 = vpop.permute.xlu0 %112
    %116 = vset.pattern.permute.xlu0 0
    %117 = vperm.xlu0 %116, %v65
    %v118 = vpop.permute.xlu0 %117
    %121 = vset.pattern.permute.xlu0 0
    %122 = vperm.xlu0 %121, %v66
    %v123 = vpop.permute.xlu0 %122
    %126 = vset.pattern.permute.xlu0 0
    %127 = vperm.xlu0 %126, %v67
    %v128 = vpop.permute.xlu0 %127
    %131 = vset.pattern.permute.xlu0 0
    %132 = vperm.xlu0 %131, %v68
    %v133 = vpop.permute.xlu0 %132
    %136 = vset.pattern.permute.xlu0 0
    %137 = vperm.xlu0 %136, %v69
    %v138 = vpop.permute.xlu0 %137
    %141 = vset.pattern.permute.xlu0 0
    %142 = vperm.xlu0 %141, %v70
    %v143 = vpop.permute.xlu0 %142
    %v145 = vsel %vm97, %v108, 0.0
    %v146 = vsel %vm98, %v113, 0.0
    %v147 = vsel %vm99, %v118, 0.0
    %v148 = vsel %vm100, %v123, 0.0
    %v149 = vsel %vm101, %v128, 0.0
    %v150 = vsel %vm102, %v133, 0.0
    %v151 = vsel %vm103, %v138, 0.0
    %v152 = vsel %vm104, %v143, 0.0
    %v153 = vrot.slane %v145, 4
    %v154 = vadd.f32 %v145, %v153
    %v155 = vrot.slane %v154, 2
    %v156 = vadd.f32 %v154, %v155
    %v157 = vrot.slane %v156, 1
    %v158 = vadd.f32 %v156, %v157
    %v159 = vrot.slane %v146, 4
    %v160 = vadd.f32 %v146, %v159
    %v161 = vrot.slane %v160, 2
    %v162 = vadd.f32 %v160, %v161
    %v163 = vrot.slane %v162, 1
    %v164 = vadd.f32 %v162, %v163
    %v165 = vrot.slane %v147, 4
    %v166 = vadd.f32 %v147, %v165
    %v167 = vrot.slane %v166, 2
    %v168 = vadd.f32 %v166, %v167
    %v169 = vrot.slane %v168, 1
    %v170 = vadd.f32 %v168, %v169
    %v171 = vrot.slane %v148, 4
    %v172 = vadd.f32 %v148, %v171
    %v173 = vrot.slane %v172, 2
    %v174 = vadd.f32 %v172, %v173
    %v175 = vrot.slane %v174, 1
    %v176 = vadd.f32 %v174, %v175
    %v177 = vrot.slane %v149, 4
    %v178 = vadd.f32 %v149, %v177
    %v179 = vrot.slane %v178, 2
    %v180 = vadd.f32 %v178, %v179
    %v181 = vrot.slane %v180, 1
    %v182 = vadd.f32 %v180, %v181
    %v183 = vrot.slane %v150, 4
    %v184 = vadd.f32 %v150, %v183
    %v185 = vrot.slane %v184, 2
    %v186 = vadd.f32 %v184, %v185
    %v187 = vrot.slane %v186, 1
    %v188 = vadd.f32 %v186, %v187
    %v189 = vrot.slane %v151, 4
    %v190 = vadd.f32 %v151, %v189
    %v191 = vrot.slane %v190, 2
    %v192 = vadd.f32 %v190, %v191
    %v193 = vrot.slane %v192, 1
    %v194 = vadd.f32 %v192, %v193
    %v195 = vrot.slane %v152, 4
    %v196 = vadd.f32 %v152, %v195
    %v197 = vrot.slane %v196, 2
    %v198 = vadd.f32 %v196, %v197
    %v199 = vrot.slane %v198, 1
    %v200 = vadd.f32 %v198, %v199
    %vm201 = vcmask 7168
    %v202 = vsel %vm201, %v63, 0.0
    %v203 = vrot.slane %v202, 4
    %v204 = vadd.f32 %v202, %v203
    %v205 = vrot.slane %v204, 2
    %v206 = vadd.f32 %v204, %v205
    %v207 = vrot.slane %v206, 1
    %v208 = vadd.f32 %v206, %v207
    %v209 = vsel %vm201, %v64, 0.0
    %v210 = vrot.slane %v209, 4
    %v211 = vadd.f32 %v209, %v210
    %v212 = vrot.slane %v211, 2
    %v213 = vadd.f32 %v211, %v212
    %v214 = vrot.slane %v213, 1
    %v215 = vadd.f32 %v213, %v214
    %v216 = vsel %vm201, %v65, 0.0
    %v217 = vrot.slane %v216, 4
    %v218 = vadd.f32 %v216, %v217
    %v219 = vrot.slane %v218, 2
    %v220 = vadd.f32 %v218, %v219
    %v221 = vrot.slane %v220, 1
    %v222 = vadd.f32 %v220, %v221
    %v223 = vsel %vm201, %v66, 0.0
    %v224 = vrot.slane %v223, 4
    %v225 = vadd.f32 %v223, %v224
    %v226 = vrot.slane %v225, 2
    %v227 = vadd.f32 %v225, %v226
    %v228 = vrot.slane %v227, 1
    %v229 = vadd.f32 %v227, %v228
    %v230 = vsel %vm201, %v67, 0.0
    %v231 = vrot.slane %v230, 4
    %v232 = vadd.f32 %v230, %v231
    %v233 = vrot.slane %v232, 2
    %v234 = vadd.f32 %v232, %v233
    %v235 = vrot.slane %v234, 1
    %v236 = vadd.f32 %v234, %v235
    %v237 = vsel %vm201, %v68, 0.0
    %v238 = vrot.slane %v237, 4
    %v239 = vadd.f32 %v237, %v238
    %v240 = vrot.slane %v239, 2
    %v241 = vadd.f32 %v239, %v240
    %v242 = vrot.slane %v241, 1
    %v243 = vadd.f32 %v241, %v242
    %v244 = vsel %vm201, %v69, 0.0
    %v245 = vrot.slane %v244, 4
    %v246 = vadd.f32 %v244, %v245
    %v247 = vrot.slane %v246, 2
    %v248 = vadd.f32 %v246, %v247
    %v249 = vrot.slane %v248, 1
    %v250 = vadd.f32 %v248, %v249
    %v251 = vsel %vm201, %v70, 0.0
    %v252 = vrot.slane %v251, 4
    %v253 = vadd.f32 %v251, %v252
    %v254 = vrot.slane %v253, 2
    %v255 = vadd.f32 %v253, %v254
    %v256 = vrot.slane %v255, 1
    %v257 = vadd.f32 %v255, %v256
    %v258 = vmax.f32 %v208, 1.0
    %v259 = vmax.f32 %v215, 1.0
    %v260 = vmax.f32 %v222, 1.0
    %v261 = vmax.f32 %v229, 1.0
    %v262 = vmax.f32 %v236, 1.0
    %v263 = vmax.f32 %v243, 1.0
    %v264 = vmax.f32 %v250, 1.0
    %v265 = vmax.f32 %v257, 1.0
    %v266 = vrcp.pop %v258
    %v267 = vmul.f32 %v258, %v266
    %v268 = vsub.f32 1.0, %v267
    %v269 = vmul.f32 %v266, %v268
    %v270 = vadd.f32 %v266, %v269
    %vm271 = vweird.f32 %v258
    %vm272 = vweird.f32 %v266
    %vm273 = vmor %vm271, %vm272
    %v274 = vsel %vm273, %v266, %v270
    %v275 = vand.u32 2147483647, %v258
    %vm276 = vcmp.eq.f32.partialorder %v275, 8.507059e+37
    %v277 = vand.u32 %v258, 2147483648
    %v278 = vor.u32 1.1754944e-38, %v277
    %v279 = vsel %vm276, %v278, %v274
    %v280 = vrcp.pop %v259
    %v281 = vmul.f32 %v259, %v280
    %v282 = vsub.f32 1.0, %v281
    %v283 = vmul.f32 %v280, %v282
    %v284 = vadd.f32 %v280, %v283
    %vm285 = vweird.f32 %v259
    %vm286 = vweird.f32 %v280
    %vm287 = vmor %vm285, %vm286
    %v288 = vsel %vm287, %v280, %v284
    %v289 = vand.u32 2147483647, %v259
    %vm290 = vcmp.eq.f32.partialorder %v289, 8.507059e+37
    %v291 = vand.u32 %v259, 2147483648
    %v292 = vor.u32 1.1754944e-38, %v291
    %v293 = vsel %vm290, %v292, %v288
    %v294 = vrcp.pop %v260
    %v295 = vmul.f32 %v260, %v294
    %v296 = vsub.f32 1.0, %v295
    %v297 = vmul.f32 %v294, %v296
    %v298 = vadd.f32 %v294, %v297
    %vm299 = vweird.f32 %v260
    %vm300 = vweird.f32 %v294
    %vm301 = vmor %vm299, %vm300
    %v302 = vsel %vm301, %v294, %v298
    %v303 = vand.u32 2147483647, %v260
    %vm304 = vcmp.eq.f32.partialorder %v303, 8.507059e+37
    %v305 = vand.u32 %v260, 2147483648
    %v306 = vor.u32 1.1754944e-38, %v305
    %v307 = vsel %vm304, %v306, %v302
    %v308 = vrcp.pop %v261
    %v309 = vmul.f32 %v261, %v308
    %v310 = vsub.f32 1.0, %v309
    %v311 = vmul.f32 %v308, %v310
    %v312 = vadd.f32 %v308, %v311
    %vm313 = vweird.f32 %v261
    %vm314 = vweird.f32 %v308
    %vm315 = vmor %vm313, %vm314
    %v316 = vsel %vm315, %v308, %v312
    %v317 = vand.u32 2147483647, %v261
    %vm318 = vcmp.eq.f32.partialorder %v317, 8.507059e+37
    %v319 = vand.u32 %v261, 2147483648
    %v320 = vor.u32 1.1754944e-38, %v319
    %v321 = vsel %vm318, %v320, %v316
    %v322 = vrcp.pop %v262
    %v323 = vmul.f32 %v262, %v322
    %v324 = vsub.f32 1.0, %v323
    %v325 = vmul.f32 %v322, %v324
    %v326 = vadd.f32 %v322, %v325
    %vm327 = vweird.f32 %v262
    %vm328 = vweird.f32 %v322
    %vm329 = vmor %vm327, %vm328
    %v330 = vsel %vm329, %v322, %v326
    %v331 = vand.u32 2147483647, %v262
    %vm332 = vcmp.eq.f32.partialorder %v331, 8.507059e+37
    %v333 = vand.u32 %v262, 2147483648
    %v334 = vor.u32 1.1754944e-38, %v333
    %v335 = vsel %vm332, %v334, %v330
    %v336 = vrcp.pop %v263
    %v337 = vmul.f32 %v263, %v336
    %v338 = vsub.f32 1.0, %v337
    %v339 = vmul.f32 %v336, %v338
    %v340 = vadd.f32 %v336, %v339
    %vm341 = vweird.f32 %v263
    %vm342 = vweird.f32 %v336
    %vm343 = vmor %vm341, %vm342
    %v344 = vsel %vm343, %v336, %v340
    %v345 = vand.u32 2147483647, %v263
    %vm346 = vcmp.eq.f32.partialorder %v345, 8.507059e+37
    %v347 = vand.u32 %v263, 2147483648
    %v348 = vor.u32 1.1754944e-38, %v347
    %v349 = vsel %vm346, %v348, %v344
    %v350 = vrcp.pop %v264
    %v351 = vmul.f32 %v264, %v350
    %v352 = vsub.f32 1.0, %v351
    %v353 = vmul.f32 %v350, %v352
    %v354 = vadd.f32 %v350, %v353
    %vm355 = vweird.f32 %v264
    %vm356 = vweird.f32 %v350
    %vm357 = vmor %vm355, %vm356
    %v358 = vsel %vm357, %v350, %v354
    %v359 = vand.u32 2147483647, %v264
    %vm360 = vcmp.eq.f32.partialorder %v359, 8.507059e+37
    %v361 = vand.u32 %v264, 2147483648
    %v362 = vor.u32 1.1754944e-38, %v361
    %v363 = vsel %vm360, %v362, %v358
    %v364 = vrcp.pop %v265
    %v365 = vmul.f32 %v265, %v364
    %v366 = vsub.f32 1.0, %v365
    %v367 = vmul.f32 %v364, %v366
    %v368 = vadd.f32 %v364, %v367
    %vm369 = vweird.f32 %v265
    %vm370 = vweird.f32 %v364
    %vm371 = vmor %vm369, %vm370
    %v372 = vsel %vm371, %v364, %v368
    %v373 = vand.u32 2147483647, %v265
    %vm374 = vcmp.eq.f32.partialorder %v373, 8.507059e+37
    %v375 = vand.u32 %v265, 2147483648
    %v376 = vor.u32 1.1754944e-38, %v375
    %v377 = vsel %vm374, %v376, %v372
    %379 = vset.pattern.permute.xlu0 0
    %380 = vperm.xlu0 %379, %v279
    %v381 = vpop.permute.xlu0 %380
    %384 = vset.pattern.permute.xlu0 0
    %385 = vperm.xlu0 %384, %v293
    %v386 = vpop.permute.xlu0 %385
    %389 = vset.pattern.permute.xlu0 0
    %390 = vperm.xlu0 %389, %v307
    %v391 = vpop.permute.xlu0 %390
    %394 = vset.pattern.permute.xlu0 0
    %395 = vperm.xlu0 %394, %v321
    %v396 = vpop.permute.xlu0 %395
    %399 = vset.pattern.permute.xlu0 0
    %400 = vperm.xlu0 %399, %v335
    %v401 = vpop.permute.xlu0 %400
    %404 = vset.pattern.permute.xlu0 0
    %405 = vperm.xlu0 %404, %v349
    %v406 = vpop.permute.xlu0 %405
    %409 = vset.pattern.permute.xlu0 0
    %410 = vperm.xlu0 %409, %v363
    %v411 = vpop.permute.xlu0 %410
    %414 = vset.pattern.permute.xlu0 0
    %415 = vperm.xlu0 %414, %v377
    %v416 = vpop.permute.xlu0 %415
    %v418 = vmul.f32 %v158, %v381
    %v419 = vmul.f32 %v164, %v386
    %v420 = vmul.f32 %v170, %v391
    %v421 = vmul.f32 %v176, %v396
    %v422 = vmul.f32 %v182, %v401
    %v423 = vmul.f32 %v188, %v406
    %v424 = vmul.f32 %v194, %v411
    %v425 = vmul.f32 %v200, %v416
    %v426 = vpack.c.bf16 %v418, %v418
    %v427 = vpack.c.bf16 %v419, %v419
    %v428 = vpack.c.bf16 %v420, %v420
    %v429 = vpack.c.bf16 %v421, %v421
    %v430 = vpack.c.bf16 %v422, %v422
    %v431 = vpack.c.bf16 %v423, %v423
    %v432 = vpack.c.bf16 %v424, %v424
    %v433 = vpack.c.bf16 %v425, %v425
    %v434 = vld [vmem:[%s2] sm:$0xf]
    %v435 = vld [vmem:[%s2 + $0x4] sm:$0xf]
    %v436 = vld [vmem:[%s2 + $0x8] sm:$0xf]
    %v437 = vld [vmem:[%s2 + $0xc] sm:$0xf]
    %v438 = vld [vmem:[%s2 + $0x10] sm:$0xf]
    %v439 = vld [vmem:[%s2 + $0x14] sm:$0xf]
    %v440 = vld [vmem:[%s2 + $0x18] sm:$0xf]
    %v441 = vld [vmem:[%s2 + $0x1c] sm:$0xf]
    %v442 = vld [vmem:[%s2 + $0x20] sm:$0xf]
    %v443 = vld [vmem:[%s2 + $0x24] sm:$0xf]
    %v444 = vld [vmem:[%s2 + $0x28] sm:$0xf]
    %v445 = vld [vmem:[%s2 + $0x2c] sm:$0xf]
    %v446 = vld [vmem:[%s2 + $0x30] sm:$0xf]
    %v447 = vld [vmem:[%s2 + $0x34] sm:$0xf]
    %v448 = vld [vmem:[%s2 + $0x38] sm:$0xf]
    %v449 = vld [vmem:[%s2 + $0x3c] sm:$0xf]
    %v450 = vld [vmem:[%s3] sm:$0x1]
    %v452 = vperm.slane %v450, 0
    %v462 = vunpack.c.l.b16 %v426
    %v463 = vunpack.c.l.b16 %v427
    %v464 = vunpack.c.l.b16 %v428
    %v465 = vunpack.c.l.b16 %v429
    %v466 = vunpack.c.l.b16 %v430
    %v467 = vunpack.c.l.b16 %v431
    %v468 = vunpack.c.l.b16 %v432
    %v469 = vunpack.c.l.b16 %v433
    %vm470 = vcmask 1041409
    %v471 = vsel %vm470, %v463, %v462
    %vm472 = vcmask 1042434
    %v473 = vsel %vm472, %v464, %v471
    %vm474 = vcmask 1043459
    %v475 = vsel %vm474, %v465, %v473
    %vm476 = vcmask 1044484
    %v477 = vsel %vm476, %v466, %v475
    %vm478 = vcmask 1045509
    %v479 = vsel %vm478, %v467, %v477
    %vm480 = vcmask 1046534
    %v481 = vsel %vm480, %v468, %v479
    %vm482 = vcmask 1047559
    %v483 = vsel %vm482, %v469, %v481
    %v484 = vpack.c.b16 %v483, %v483
    %v502 = vunpack.c.l.b16 %v434
    %v503 = vunpack.c.l.b16 %v435
    %v504 = vunpack.c.l.b16 %v436
    %v505 = vunpack.c.l.b16 %v437
    %v506 = vunpack.c.l.b16 %v438
    %v507 = vunpack.c.l.b16 %v439
    %v508 = vunpack.c.l.b16 %v440
    %v509 = vunpack.c.l.b16 %v441
    %v510 = vunpack.c.l.b16 %v442
    %v511 = vunpack.c.l.b16 %v443
    %v512 = vunpack.c.l.b16 %v444
    %v513 = vunpack.c.l.b16 %v445
    %v514 = vunpack.c.l.b16 %v446
    %v515 = vunpack.c.l.b16 %v447
    %v516 = vunpack.c.l.b16 %v448
    %v517 = vunpack.c.l.b16 %v449
    %v518 = vpack.c.b16 %v503, %v502
    %v519 = vpack.c.b16 %v505, %v504
    %v520 = vpack.c.b16 %v507, %v506
    %v521 = vpack.c.b16 %v509, %v508
    %v522 = vpack.c.b16 %v511, %v510
    %v523 = vpack.c.b16 %v513, %v512
    %v524 = vpack.c.b16 %v515, %v514
    %v525 = vpack.c.b16 %v517, %v516
    %534 = vmatpush.bf16.msra.mxu0 %v525
    %535 = vmatpush.bf16.msra.mxu0 %v524
    %536 = vmatpush.bf16.msra.mxu0 %v523
    %537 = vmatpush.bf16.msra.mxu0 %v522
    %538 = vmatpush.bf16.msra.mxu0 %v521
    %539 = vmatpush.bf16.msra.mxu0 %v520
    %540 = vmatpush.bf16.msra.mxu0 %v519
    %541 = vmatpush.bf16.msra.mxu0 %v518
    %542 = vmatmul.bf16.gmra.mxu0 %v484
    %v543 = vpop.f32.mrf.mxu0
    %v544 = vadd.f32 %v452, %v543
    %v545 = vpop.f32.mrf.mxu0
    %546 = vdwg.mxu0
    %v547 = vtanh.pop %v544
    %v548 = vpack.c.bf16 %v547, %v547
    %v549 = vld [vmem:[%s4] sm:$0xff]
    %v550 = vld [vmem:[%s4 + $0x8] sm:$0xff]
    %v551 = vld [vmem:[%s4 + $0x10] sm:$0xff]
    %v552 = vld [vmem:[%s4 + $0x18] sm:$0xff]
    %v553 = vld [vmem:[%s4 + $0x20] sm:$0xff]
    %v554 = vld [vmem:[%s4 + $0x28] sm:$0xff]
    %v555 = vld [vmem:[%s4 + $0x30] sm:$0xff]
    %v556 = vld [vmem:[%s4 + $0x38] sm:$0xff]
    %v557 = vld [vmem:[%s5] sm:$0xf]
    %v559 = vperm.slane %v557, 0
    %v560 = vperm.slane %v557, 1
    %v561 = vperm.slane %v557, 2
    %v562 = vperm.slane %v557, 3
    %v575 = vunpack.c.l.b16 %v549
    %v576 = vunpack.c.h.b16 %v549
    %v577 = vunpack.c.l.b16 %v550
    %v578 = vunpack.c.h.b16 %v550
    %v579 = vunpack.c.l.b16 %v551
    %v580 = vunpack.c.h.b16 %v551
    %v581 = vunpack.c.l.b16 %v552
    %v582 = vunpack.c.h.b16 %v552
    %v583 = vunpack.c.l.b16 %v553
    %v584 = vunpack.c.h.b16 %v553
    %v585 = vunpack.c.l.b16 %v554
    %v586 = vunpack.c.h.b16 %v554
    %v587 = vunpack.c.l.b16 %v555
    %v588 = vunpack.c.h.b16 %v555
    %v589 = vunpack.c.l.b16 %v556
    %v590 = vunpack.c.h.b16 %v556
    %v591 = vpack.c.b16 %v579, %v575
    %v592 = vpack.c.b16 %v580, %v576
    %v593 = vpack.c.b16 %v581, %v577
    %v594 = vpack.c.b16 %v582, %v578
    %v595 = vpack.c.b16 %v587, %v583
    %v596 = vpack.c.b16 %v588, %v584
    %v597 = vpack.c.b16 %v589, %v585
    %v598 = vpack.c.b16 %v590, %v586
    %vm607 = vcmask 261120
    %v609 = vsel %vm607, %v548, 0
    %611 = vmatpush.bf16.msra.mxu0 0
    %612 = vmatpush.bf16.msra.mxu0 0
    %613 = vmatpush.bf16.msra.mxu0 0
    %614 = vmatpush.bf16.msra.mxu0 0
    %615 = vmatpush.bf16.msra.mxu0 0
    %616 = vmatpush.bf16.msra.mxu0 0
    %617 = vmatpush.bf16.msra.mxu0 %v595
    %618 = vmatpush.bf16.msra.mxu0 %v591
    %619 = vmatmul.bf16.gmra.mxu0 %v609
    %v620 = vpop.f32.mrf.mxu0
    %v621 = vadd.f32 %v559, %v620
    %v622 = vpop.f32.mrf.mxu0
    %623 = vdwg.mxu0
    %624 = vmatpush.bf16.msra.mxu0 0
    %625 = vmatpush.bf16.msra.mxu0 0
    %626 = vmatpush.bf16.msra.mxu0 0
    %627 = vmatpush.bf16.msra.mxu0 0
    %628 = vmatpush.bf16.msra.mxu0 0
    %629 = vmatpush.bf16.msra.mxu0 0
    %630 = vmatpush.bf16.msra.mxu0 %v596
    %631 = vmatpush.bf16.msra.mxu0 %v592
    %632 = vmatmul.bf16.gmra.mxu0 %v609
    %v633 = vpop.f32.mrf.mxu0
    %v634 = vadd.f32 %v560, %v633
    %v635 = vpop.f32.mrf.mxu0
    %636 = vdwg.mxu0
    %637 = vmatpush.bf16.msra.mxu0 0
    %638 = vmatpush.bf16.msra.mxu0 0
    %639 = vmatpush.bf16.msra.mxu0 0
    %640 = vmatpush.bf16.msra.mxu0 0
    %641 = vmatpush.bf16.msra.mxu0 0
    %642 = vmatpush.bf16.msra.mxu0 0
    %643 = vmatpush.bf16.msra.mxu0 %v597
    %644 = vmatpush.bf16.msra.mxu0 %v593
    %645 = vmatmul.bf16.gmra.mxu0 %v609
    %v646 = vpop.f32.mrf.mxu0
    %v647 = vadd.f32 %v561, %v646
    %v648 = vpop.f32.mrf.mxu0
    %649 = vdwg.mxu0
    %650 = vmatpush.bf16.msra.mxu0 0
    %651 = vmatpush.bf16.msra.mxu0 0
    %652 = vmatpush.bf16.msra.mxu0 0
    %653 = vmatpush.bf16.msra.mxu0 0
    %654 = vmatpush.bf16.msra.mxu0 0
    %655 = vmatpush.bf16.msra.mxu0 0
    %656 = vmatpush.bf16.msra.mxu0 %v598
    %657 = vmatpush.bf16.msra.mxu0 %v594
    %658 = vmatmul.bf16.gmra.mxu0 %v609
    %v659 = vpop.f32.mrf.mxu0
    %v660 = vadd.f32 %v562, %v659
    %v661 = vpop.f32.mrf.mxu0
    %662 = vdwg.mxu0
    %v663 = vmax.f32 %v621, 0.0
    %v664 = vmax.f32 %v634, 0.0
    %v665 = vmax.f32 %v647, 0.0
    %v666 = vmax.f32 %v660, 0.0
    %v667 = vpack.c.bf16 %v663, %v663
    %v668 = vpack.c.bf16 %v664, %v664
    %v669 = vpack.c.bf16 %v665, %v665
    %v670 = vpack.c.bf16 %v666, %v666
    %v671 = vld [vmem:[#allocation2] sm:$0xf]
    %v672 = vld [vmem:[#allocation2 + $0x4] sm:$0xf]
    %v673 = vld [vmem:[#allocation2 + $0x8] sm:$0xf]
    %v674 = vld [vmem:[#allocation2 + $0xc] sm:$0xf]
    %v675 = vld [vmem:[#allocation2 + $0x10] sm:$0xf]
    %v676 = vld [vmem:[#allocation2 + $0x14] sm:$0xf]
    %v677 = vld [vmem:[#allocation2 + $0x18] sm:$0xf]
    %v678 = vld [vmem:[#allocation2 + $0x1c] sm:$0xf]
    %v679 = vld [vmem:[#allocation2 + $0x20] sm:$0xf]
    %v680 = vld [vmem:[#allocation2 + $0x24] sm:$0xf]
    %v681 = vld [vmem:[#allocation2 + $0x28] sm:$0xf]
    %v682 = vld [vmem:[#allocation2 + $0x2c] sm:$0xf]
    %v683 = vld [vmem:[#allocation2 + $0x30] sm:$0xf]
    %v684 = vld [vmem:[#allocation2 + $0x34] sm:$0xf]
    %v685 = vld [vmem:[#allocation2 + $0x38] sm:$0xf]
    %v686 = vld [vmem:[#allocation2 + $0x3c] sm:$0xf]
    %v687 = vld [vmem:[#allocation2 + $0x40] sm:$0xf]
    %v688 = vld [vmem:[#allocation2 + $0x44] sm:$0xf]
    %v689 = vld [vmem:[#allocation2 + $0x48] sm:$0xf]
    %v690 = vld [vmem:[#allocation2 + $0x4c] sm:$0xf]
    %v691 = vld [vmem:[#allocation2 + $0x50] sm:$0xf]
    %v692 = vld [vmem:[#allocation2 + $0x54] sm:$0xf]
    %v693 = vld [vmem:[#allocation2 + $0x58] sm:$0xf]
    %v694 = vld [vmem:[#allocation2 + $0x5c] sm:$0xf]
    %v695 = vld [vmem:[#allocation2 + $0x60] sm:$0xf]
    %v696 = vld [vmem:[#allocation2 + $0x64] sm:$0xf]
    %v697 = vld [vmem:[#allocation2 + $0x68] sm:$0xf]
    %v698 = vld [vmem:[#allocation2 + $0x6c] sm:$0xf]
    %v699 = vld [vmem:[#allocation2 + $0x70] sm:$0xf]
    %v700 = vld [vmem:[#allocation2 + $0x74] sm:$0xf]
    %v701 = vld [vmem:[#allocation2 + $0x78] sm:$0xf]
    %v702 = vld [vmem:[#allocation2 + $0x7c] sm:$0xf]
    %v703 = vld [vmem:[#allocation2 + $0x80] sm:$0xf]
    %v704 = vld [vmem:[#allocation2 + $0x84] sm:$0xf]
    %v705 = vld [vmem:[#allocation2 + $0x88] sm:$0xf]
    %v706 = vld [vmem:[#allocation2 + $0x8c] sm:$0xf]
    %v707 = vld [vmem:[#allocation2 + $0x90] sm:$0xf]
    %v708 = vld [vmem:[#allocation2 + $0x94] sm:$0xf]
    %v709 = vld [vmem:[#allocation2 + $0x98] sm:$0xf]
    %v710 = vld [vmem:[#allocation2 + $0x9c] sm:$0xf]
    %v711 = vld [vmem:[#allocation2 + $0xa0] sm:$0xf]
    %v712 = vld [vmem:[#allocation2 + $0xa4] sm:$0xf]
    %v713 = vld [vmem:[#allocation2 + $0xa8] sm:$0xf]
    %v714 = vld [vmem:[#allocation2 + $0xac] sm:$0xf]
    %v715 = vld [vmem:[#allocation2 + $0xb0] sm:$0xf]
    %v716 = vld [vmem:[#allocation2 + $0xb4] sm:$0xf]
    %v717 = vld [vmem:[#allocation2 + $0xb8] sm:$0xf]
    %v718 = vld [vmem:[#allocation2 + $0xbc] sm:$0xf]
    %v719 = vld [vmem:[#allocation2 + $0xc0] sm:$0xf]
    %v720 = vld [vmem:[#allocation2 + $0xc4] sm:$0xf]
    %v721 = vld [vmem:[#allocation2 + $0xc8] sm:$0xf]
    %v722 = vld [vmem:[#allocation2 + $0xcc] sm:$0xf]
    %v723 = vld [vmem:[#allocation2 + $0xd0] sm:$0xf]
    %v724 = vld [vmem:[#allocation2 + $0xd4] sm:$0xf]
    %v725 = vld [vmem:[#allocation2 + $0xd8] sm:$0xf]
    %v726 = vld [vmem:[#allocation2 + $0xdc] sm:$0xf]
    %v727 = vld [vmem:[#allocation2 + $0xe0] sm:$0xf]
    %v728 = vld [vmem:[#allocation2 + $0xe4] sm:$0xf]
    %v729 = vld [vmem:[#allocation2 + $0xe8] sm:$0xf]
    %v730 = vld [vmem:[#allocation2 + $0xec] sm:$0xf]
    %v731 = vld [vmem:[#allocation2 + $0xf0] sm:$0xf]
    %v732 = vld [vmem:[#allocation2 + $0xf4] sm:$0xf]
    %v733 = vld [vmem:[#allocation2 + $0xf8] sm:$0xf]
    %v734 = vld [vmem:[#allocation2 + $0xfc] sm:$0xf]
    %v735 = vld [vmem:[%s7] sm:$0x1]
    %v737 = vperm.slane %v735, 0
    %v803 = vunpack.c.l.b16 %v671
    %v804 = vunpack.c.l.b16 %v672
    %v805 = vunpack.c.l.b16 %v673
    %v806 = vunpack.c.l.b16 %v674
    %v807 = vunpack.c.l.b16 %v675
    %v808 = vunpack.c.l.b16 %v676
    %v809 = vunpack.c.l.b16 %v677
    %v810 = vunpack.c.l.b16 %v678
    %v811 = vunpack.c.l.b16 %v679
    %v812 = vunpack.c.l.b16 %v680
    %v813 = vunpack.c.l.b16 %v681
    %v814 = vunpack.c.l.b16 %v682
    %v815 = vunpack.c.l.b16 %v683
    %v816 = vunpack.c.l.b16 %v684
    %v817 = vunpack.c.l.b16 %v685
    %v818 = vunpack.c.l.b16 %v686
    %v819 = vunpack.c.l.b16 %v687
    %v820 = vunpack.c.l.b16 %v688
    %v821 = vunpack.c.l.b16 %v689
    %v822 = vunpack.c.l.b16 %v690
    %v823 = vunpack.c.l.b16 %v691
    %v824 = vunpack.c.l.b16 %v692
    %v825 = vunpack.c.l.b16 %v693
    %v826 = vunpack.c.l.b16 %v694
    %v827 = vunpack.c.l.b16 %v695
    %v828 = vunpack.c.l.b16 %v696
    %v829 = vunpack.c.l.b16 %v697
    %v830 = vunpack.c.l.b16 %v698
    %v831 = vunpack.c.l.b16 %v699
    %v832 = vunpack.c.l.b16 %v700
    %v833 = vunpack.c.l.b16 %v701
    %v834 = vunpack.c.l.b16 %v702
    %v835 = vunpack.c.l.b16 %v703
    %v836 = vunpack.c.l.b16 %v704
    %v837 = vunpack.c.l.b16 %v705
    %v838 = vunpack.c.l.b16 %v706
    %v839 = vunpack.c.l.b16 %v707
    %v840 = vunpack.c.l.b16 %v708
    %v841 = vunpack.c.l.b16 %v709
    %v842 = vunpack.c.l.b16 %v710
    %v843 = vunpack.c.l.b16 %v711
    %v844 = vunpack.c.l.b16 %v712
    %v845 = vunpack.c.l.b16 %v713
    %v846 = vunpack.c.l.b16 %v714
    %v847 = vunpack.c.l.b16 %v715
    %v848 = vunpack.c.l.b16 %v716
    %v849 = vunpack.c.l.b16 %v717
    %v850 = vunpack.c.l.b16 %v718
    %v851 = vunpack.c.l.b16 %v719
    %v852 = vunpack.c.l.b16 %v720
    %v853 = vunpack.c.l.b16 %v721
    %v854 = vunpack.c.l.b16 %v722
    %v855 = vunpack.c.l.b16 %v723
    %v856 = vunpack.c.l.b16 %v724
    %v857 = vunpack.c.l.b16 %v725
    %v858 = vunpack.c.l.b16 %v726
    %v859 = vunpack.c.l.b16 %v727
    %v860 = vunpack.c.l.b16 %v728
    %v861 = vunpack.c.l.b16 %v729
    %v862 = vunpack.c.l.b16 %v730
    %v863 = vunpack.c.l.b16 %v731
    %v864 = vunpack.c.l.b16 %v732
    %v865 = vunpack.c.l.b16 %v733
    %v866 = vunpack.c.l.b16 %v734
    %v867 = vpack.c.b16 %v804, %v803
    %v868 = vpack.c.b16 %v806, %v805
    %v869 = vpack.c.b16 %v808, %v807
    %v870 = vpack.c.b16 %v810, %v809
    %v871 = vpack.c.b16 %v812, %v811
    %v872 = vpack.c.b16 %v814, %v813
    %v873 = vpack.c.b16 %v816, %v815
    %v874 = vpack.c.b16 %v818, %v817
    %v875 = vpack.c.b16 %v820, %v819
    %v876 = vpack.c.b16 %v822, %v821
    %v877 = vpack.c.b16 %v824, %v823
    %v878 = vpack.c.b16 %v826, %v825
    %v879 = vpack.c.b16 %v828, %v827
    %v880 = vpack.c.b16 %v830, %v829
    %v881 = vpack.c.b16 %v832, %v831
    %v882 = vpack.c.b16 %v834, %v833
    %v883 = vpack.c.b16 %v836, %v835
    %v884 = vpack.c.b16 %v838, %v837
    %v885 = vpack.c.b16 %v840, %v839
    %v886 = vpack.c.b16 %v842, %v841
    %v887 = vpack.c.b16 %v844, %v843
    %v888 = vpack.c.b16 %v846, %v845
    %v889 = vpack.c.b16 %v848, %v847
    %v890 = vpack.c.b16 %v850, %v849
    %v891 = vpack.c.b16 %v852, %v851
    %v892 = vpack.c.b16 %v854, %v853
    %v893 = vpack.c.b16 %v856, %v855
    %v894 = vpack.c.b16 %v858, %v857
    %v895 = vpack.c.b16 %v860, %v859
    %v896 = vpack.c.b16 %v862, %v861
    %v897 = vpack.c.b16 %v864, %v863
    %v898 = vpack.c.b16 %v866, %v865
    %931 = vmatpush.bf16.msra.mxu0 %v874
    %932 = vmatpush.bf16.msra.mxu0 %v873
    %933 = vmatpush.bf16.msra.mxu0 %v872
    %934 = vmatpush.bf16.msra.mxu0 %v871
    %935 = vmatpush.bf16.msra.mxu0 %v870
    %936 = vmatpush.bf16.msra.mxu0 %v869
    %937 = vmatpush.bf16.msra.mxu0 %v868
    %938 = vmatpush.bf16.msra.mxu0 %v867
    %939 = vmatmul.bf16.gmra.mxu0 %v667
    %v940 = vpop.f32.mrf.mxu0
    %v941 = vadd.f32 %v737, %v940
    %v942 = vpop.f32.mrf.mxu0
    %943 = vdwg.mxu0
    %944 = vmatpush.bf16.msra.mxu0 %v882
    %945 = vmatpush.bf16.msra.mxu0 %v881
    %946 = vmatpush.bf16.msra.mxu0 %v880
    %947 = vmatpush.bf16.msra.mxu0 %v879
    %948 = vmatpush.bf16.msra.mxu0 %v878
    %949 = vmatpush.bf16.msra.mxu0 %v877
    %950 = vmatpush.bf16.msra.mxu0 %v876
    %951 = vmatpush.bf16.msra.mxu0 %v875
    %952 = vmatmul.bf16.gmra.mxu0 %v668
    %v953 = vpop.f32.mrf.mxu0
    %v954 = vadd.f32 %v941, %v953
    %v955 = vpop.f32.mrf.mxu0
    %956 = vdwg.mxu0
    %957 = vmatpush.bf16.msra.mxu0 %v890
    %958 = vmatpush.bf16.msra.mxu0 %v889
    %959 = vmatpush.bf16.msra.mxu0 %v888
    %960 = vmatpush.bf16.msra.mxu0 %v887
    %961 = vmatpush.bf16.msra.mxu0 %v886
    %962 = vmatpush.bf16.msra.mxu0 %v885
    %963 = vmatpush.bf16.msra.mxu0 %v884
    %964 = vmatpush.bf16.msra.mxu0 %v883
    %965 = vmatmul.bf16.gmra.mxu0 %v669
    %v966 = vpop.f32.mrf.mxu0
    %v967 = vadd.f32 %v954, %v966
    %v968 = vpop.f32.mrf.mxu0
    %969 = vdwg.mxu0
    %970 = vmatpush.bf16.msra.mxu0 %v898
    %971 = vmatpush.bf16.msra.mxu0 %v897
    %972 = vmatpush.bf16.msra.mxu0 %v896
    %973 = vmatpush.bf16.msra.mxu0 %v895
    %974 = vmatpush.bf16.msra.mxu0 %v894
    %975 = vmatpush.bf16.msra.mxu0 %v893
    %976 = vmatpush.bf16.msra.mxu0 %v892
    %977 = vmatpush.bf16.msra.mxu0 %v891
    %978 = vmatmul.bf16.gmra.mxu0 %v670
    %v979 = vpop.f32.mrf.mxu0
    %v980 = vadd.f32 %v967, %v979
    %v981 = vpop.f32.mrf.mxu0
    %982 = vdwg.mxu0
    %983 = vst [vmem:[#allocation5] sm:$0xff] %v980
    // Predicated region
    $region38: #{news_classifier_forward.1} parent=1 // pred_check
      _
    $region39: #{news_classifier_forward.1} parent=1 // pred_check_branch
      %985 = sbr.rel (0) target = $region41
    $region40: #{news_classifier_forward.1} parent=1 // pred_region
      %987 = vsyncadd [#allocation4], 0
      %s989 = sshll.u32 [#allocation5], 4
      %s990 = int_to_ptr.vmem [resolvable:$true] %s989
      %s991 = sshll.u32 %s8, 4
      %s992 = int_to_ptr.hbm [resolvable:$true] %s991
      %994 = dma.vmem_to_hbm [thread:$0]  %s990, 128, %s992, [#allocation4]
    $region41: #{news_classifier_forward.1} parent=1 // pred_fallthru
      _
    // Predicated region
    $region42: #{news_classifier_forward.1} parent=1 // pred_check
      _
    $region43: #{news_classifier_forward.1} parent=1 // pred_check_branch
      %996 = sbr.rel (0) target = $region45
    $region44: #{news_classifier_forward.1} parent=1 // pred_region
      %998 = dma.done [#allocation4], 128
    $region45: #{news_classifier_forward.1} parent=1 // pred_fallthru
      _
    %999 = vsyncpa [#allocation3], 1
    %1000 = vsyncpa [#allocation4], 1

</llo_original>
